<compile_context>
chip_gen: v7x
topology: tpu7x:2x2x1
jax: 0.10.0
libtpu: 0.0.40
codegen_flags: <defaults>
</compile_context>

<pallas_src>
import jax
import jax.numpy as jnp
from jax.experimental import pallas as pl
from jax.experimental.pallas import tpu as pltpu

IN_FEATURES = 4096
HIDDEN = 1028
OUT_FEATURES = 1

_SMALL_BATCH_XLA_CUTOFF = 64   # below this, kernel-launch overhead > actual work
_MAX_BATCH_TILE = 512          # 512x4096 f32 block = 8 MiB; 2x buffered fits all gens


def head_kernel(x_ref, w_ref, b_ref, o_ref):
    # x: (TB, 4096), w: (1, 4096) fused-weight row, b: (1, 1), o: (TB, 1)
    x = x_ref[...].astype(jnp.float32)            # f32 accumulation even if x streams as bf16
    # N=1 matvec on VPU/XLU: broadcast-multiply + cross-lane row reduce.
    logits = jnp.sum(x * w_ref[...], axis=-1, keepdims=True) + b_ref[...]
    o_ref[...] = jax.nn.sigmoid(logits).astype(o_ref.dtype)
    # NOTE: out last dim is 1 (masked vst) — intentionally left non-lane-dense;
    # output writeback is 1/4096 of input traffic, densifying it would cost more.


def fuse_head_params(w1, b1, w2, b2):
    """Fold Linear(4096,1028) -> Linear(1028,1) into a single affine map.

    Call ONCE at parameter-load/init time (NOT per forward call): this matmul
    streams the full ~16.9 MB f32 w1, which would otherwise dominate per-call
    HBM traffic.  Exact in real arithmetic (no activation between the Linears).
    """
    w_fused = (w1 @ w2).reshape(1, IN_FEATURES)          # (1, 4096), lane-dense
    b_fused = (b1 @ w2 + b2).reshape(1, OUT_FEATURES)    # (1, 1)
    return w_fused, b_fused


def _pick_batch_tile(B):
    if B <= 16:
        return B                       # single block; block dim == full dim is legal
    tb = -(-B // 2)                    # cdiv(B, 2): guarantee >= 2 blocks (v7x: both TCs busy)
    tb = ((tb + 7) // 8) * 8           # sublane-align (multiple of 8)
    return min(_MAX_BATCH_TILE, tb)


def head_forward(x_nchw, w_fused, b_fused, *, x_dtype=None, use_xla_small_batch=True):
    """Forward pass with pre-fused params (see fuse_head_params)."""
    B = x_nchw.shape[0]
    x_flat = x_nchw.reshape(B, -1)     # torch .view(B, -1)
    assert x_flat.shape[1] == IN_FEATURES, "flattened feature dim must be 4096"
    if x_dtype is not None:
        x_flat = x_flat.astype(x_dtype)    # e.g. bf16 streaming: halves HBM read of x

    if use_xla_small_batch and B < _SMALL_BATCH_XLA_CUTOFF:
        # Tiny batch: plain XLA dot on the cached 16 KB fused weight is as fast
        # or faster than paying kernel-launch + pipeline-step overhead.
        logits = x_flat.astype(jnp.float32) @ w_fused.reshape(IN_FEATURES, 1) + b_fused
        return jax.nn.sigmoid(logits)

    TB = _pick_batch_tile(B)
    grid = (pl.cdiv(B, TB),)

    itemsize = jnp.dtype(x_flat.dtype).itemsize
    cost = pl.CostEstimate(
        flops=2 * B * IN_FEATURES,
        transcendentals=B,                                   # one sigmoid per row
        bytes_accessed=B * IN_FEATURES * itemsize            # x stream (dominant)
        + IN_FEATURES * 4 + OUT_FEATURES * 4                 # fused weight + bias
        + B * OUT_FEATURES * 4,                              # output
    )

    out = pl.pallas_call(
        head_kernel,
        out_shape=jax.ShapeDtypeStruct((B, OUT_FEATURES), jnp.float32),
        grid=grid,
        in_specs=[
            pl.BlockSpec((TB, IN_FEATURES), lambda i: (i, 0)),       # x block (pipelined)
            pl.BlockSpec((1, IN_FEATURES), lambda i: (0, 0)),        # fused weight (resident)
            pl.BlockSpec((1, OUT_FEATURES), lambda i: (0, 0)),       # fused bias (resident)
        ],
        out_specs=pl.BlockSpec((TB, OUT_FEATURES), lambda i: (i, 0)),
        compiler_params=pltpu.CompilerParams(
            dimension_semantics=("parallel",),                       # v7x: shard blocks over 2 TCs
            vmem_limit_bytes=24 << 20,                               # 2x8 MiB x-buffers + slack
        ),
        cost_estimate=cost,
    )(x_flat, w_fused, b_fused)
    return out


def init_params(key):
    """Deterministic init mirroring nn.Linear default: U(-1/sqrt(fan_in), 1/sqrt(fan_in))."""
    k1, k2, k3, k4 = jax.random.split(key, 4)
    bound1 = 1.0 / (IN_FEATURES ** 0.5)
    bound2 = 1.0 / (HIDDEN ** 0.5)
    # stored as (in, out) == transposed PyTorch (out, in) weight
    w1 = jax.random.uniform(k1, (IN_FEATURES, HIDDEN), jnp.float32, -bound1, bound1)
    b1 = jax.random.uniform(k2, (1, HIDDEN), jnp.float32, -bound1, bound1)
    w2 = jax.random.uniform(k3, (HIDDEN, OUT_FEATURES), jnp.float32, -bound2, bound2)
    b2 = jax.random.uniform(k4, (1, OUT_FEATURES), jnp.float32, -bound2, bound2)
    return w1, b1, w2, b2


def head_reference(x_nchw, w1, b1, w2, b2):
    """Pure-JAX reference, module-faithful two-matmul path."""
    x = x_nchw.reshape(x_nchw.shape[0], -1)
    h = x @ w1 + b1
    logits = h @ w2 + b2
    return jax.nn.sigmoid(logits)


if __name__ == "__main__":
    key = jax.random.PRNGKey(0)
    kx1, kx2, kp = jax.random.split(key, 3)

    w1, b1, w2, b2 = init_params(kp)
    # Fold once, outside the per-call path (the key perf fix from the review).
    w_fused, b_fused = fuse_head_params(w1, b1, w2, b2)

    C, H, W = 16, 16, 16   # C*H*W = 4096, as Linear(4096, ...) requires

    # --- Pallas-kernel path: B large enough to use the kernel; tile picker
    # splits it into 2 blocks of 64 rows -> parallel axis usable by v7x's 2 TCs.
    B_big = 128
    x_big = jax.random.normal(kx1, (B_big, C, H, W), dtype=jnp.float32)
    out_big = jax.block_until_ready(head_forward(x_big, w_fused, b_fused))
    ref_big = head_reference(x_big, w1, b1, w2, b2)
    assert out_big.shape == (B_big, OUT_FEATURES), out_big.shape
    # Fused (single-affine) path vs two-matmul reference: identical in real
    # arithmetic; allow small f32 accumulation-order differences.
    assert jnp.allclose(out_big, ref_big, atol=2e-4, rtol=2e-4), "pallas path mismatch"

    # --- Tiny-batch fast path (plain XLA dot on cached fused weights).
    B_small = 2
    x_small = jax.random.normal(kx2, (B_small, C, H, W), dtype=jnp.float32)
    out_small = jax.block_until_ready(head_forward(x_small, w_fused, b_fused))
    ref_small = head_reference(x_small, w1, b1, w2, b2)
    assert out_small.shape == (B_small, OUT_FEATURES), out_small.shape
    assert jnp.allclose(out_small, ref_small, atol=2e-4, rtol=2e-4), "small-batch path mismatch"

    print("KERNEL_OK")
</pallas_src>

<mosaic_0001>
module attributes {stable_mosaic.version = 11 : i64} {
  func.func @head_kernel(%arg0: i32, %arg1: memref<64x4096xf32, #tpu.memory_space<vmem>>, %arg2: memref<1x4096xf32, #tpu.memory_space<vmem>>, %arg3: memref<1x1xf32, #tpu.memory_space<vmem>>, %arg4: memref<64x1xf32, #tpu.memory_space<vmem>>) attributes {dimension_semantics = [#tpu.dimension_semantics<parallel>], iteration_bounds = array<i64: 2>, scalar_prefetch = 0 : i64, scratch_operands = 0 : i64, tpu.core_type = #tpu.core_type<tc>, window_params = [{transform_indices = @transform_0, window_bounds = array<i64: 64, 4096>}, {pipeline_mode = #tpu.pipeline_mode<synchronous>, transform_indices = @transform_1, window_bounds = array<i64: 1, 4096>}, {pipeline_mode = #tpu.pipeline_mode<synchronous>, transform_indices = @transform_2, window_bounds = array<i64: 1, 1>}, {transform_indices = @transform_3, window_bounds = array<i64: 64, 1>}]} {
    %c0 = arith.constant 0 : index
    %c0_0 = arith.constant 0 : index
    %0 = vector.load %arg1[%c0, %c0_0] : memref<64x4096xf32, #tpu.memory_space<vmem>>, vector<64x4096xf32>
    %c0_1 = arith.constant 0 : index
    %c0_2 = arith.constant 0 : index
    %1 = vector.load %arg2[%c0_1, %c0_2] : memref<1x4096xf32, #tpu.memory_space<vmem>>, vector<1x4096xf32>
    %2 = vector.broadcast %1 : vector<1x4096xf32> to vector<64x4096xf32>
    %3 = arith.mulf %0, %2 : vector<64x4096xf32>
    %cst = arith.constant dense<0.000000e+00> : vector<64xf32>
    %4 = vector.multi_reduction <add>, %3, %cst [1] : vector<64x4096xf32> to vector<64xf32>
    %5 = vector.shape_cast %4 : vector<64xf32> to vector<64x1xf32>
    %c0_3 = arith.constant 0 : index
    %c0_4 = arith.constant 0 : index
    %6 = vector.load %arg3[%c0_3, %c0_4] : memref<1x1xf32, #tpu.memory_space<vmem>>, vector<1x1xf32>
    %7 = vector.broadcast %6 : vector<1x1xf32> to vector<64x1xf32>
    %8 = arith.addf %5, %7 : vector<64x1xf32>
    %9 = arith.negf %8 : vector<64x1xf32>
    %10 = math.exp %9 : vector<64x1xf32>
    %cst_5 = arith.constant 1.000000e+00 : f32
    %11 = vector.broadcast %cst_5 : f32 to vector<64x1xf32>
    %12 = arith.addf %11, %10 : vector<64x1xf32>
    %13 = arith.divf %11, %12 : vector<64x1xf32>
    %c0_6 = arith.constant 0 : index
    %c0_7 = arith.constant 0 : index
    %14 = vector.load %arg4[%c0_6, %c0_7] : memref<64x1xf32, #tpu.memory_space<vmem>>, vector<64x1xf32>
    tpu.vector_store %arg4[%c0_6, %c0_7], %13 {strides = array<i32>} : memref<64x1xf32, #tpu.memory_space<vmem>>, vector<64x1xf32>,
    return
  }
  func.func @transform_0(%arg0: i32) -> (i32, i32) {
    %c0_i32 = arith.constant 0 : i32
    %c0_i32_0 = arith.constant 0 : i32
    return %arg0, %c0_i32 : i32, i32
  }
  func.func @transform_1(%arg0: i32) -> (i32, i32) {
    %c0_i32 = arith.constant 0 : i32
    %c0_i32_0 = arith.constant 0 : i32
    %c0_i32_1 = arith.constant 0 : i32
    return %c0_i32, %c0_i32_0 : i32, i32
  }
  func.func @transform_2(%arg0: i32) -> (i32, i32) {
    %c0_i32 = arith.constant 0 : i32
    %c0_i32_0 = arith.constant 0 : i32
    %c0_i32_1 = arith.constant 0 : i32
    return %c0_i32, %c0_i32_0 : i32, i32
  }
  func.func @transform_3(%arg0: i32) -> (i32, i32) {
    %c0_i32 = arith.constant 0 : i32
    %c0_i32_0 = arith.constant 0 : i32
    return %arg0, %c0_i32 : i32, i32
  }
}

</mosaic_0001>

<llo_original>
// kernel: tpu_custom_call.1
$region0: #{tpu_custom_call.1}
  #allocation0 [shape = 'u32[]', space=smem, size = 0x4, offset = 0x4, fixed_abs, tag = 'smem constant byte address 0x4 - core index']
  #allocation1 [shape = 'u32[144,128]{1,0:T(1,128)}', space=vmem, size = 0x12000, scoped, tag = 'internal scratch']
  #allocation2 [shape = 'f32[1,1]{1,0:T(1,128)S(1)}', space=vmem, size = 0x200, scoped, tag = 'scoped memory for tpu_custom_call.1']
  %s0 = inlined_call_operand.hbm [shape: f32[128,4096], index: 0, kind: input, shape index: {}]
  %s1 = inlined_call_operand.hbm [shape: f32[1,4096], index: 1, kind: input, shape index: {}]
  %s2 = inlined_call_operand.<no memory space> [shape: f32[1,1], index: 2, kind: input, shape index: {}]
  %s3 = inlined_call_operand.vmem [shape: f32[128,1], index: 3, kind: output, shape index: {}]
  %s4 = sld [smem:[#allocation0]]
  $region53: #{tpu_custom_call.1} parent=0
    _
  %s6 = ssub.s32 1, %s4
  %s7 = scalar_select 0, %s6, %s4
  %v8 = vstv %s2
  %9 = vst [vmem:[#allocation2] sm:$0x1] %v8
  $region1: #{tpu_custom_call.1} parent=0
    #allocation3 [shape = 'u8[2097152]{0}', space=vmem, size = 0x200000, scoped, tag = 'input window, operand 0']
    #allocation4 [shape = 's32[2]{0}', space=sflag, size = 0x8, scoped, tag = 'scoped memory for tpu_custom_call.1']
    #allocation5 [shape = 'u8[16384]{0}', space=vmem, size = 0x4000, scoped, tag = 'input window, operand 1, single buffered']
    #allocation6 [shape = 's32[1]{0}', space=sflag, size = 0x4, scoped, tag = 'scoped memory for tpu_custom_call.1']
    %10 = vsyncpa [#allocation4], 0
    %s11 = scalar_lea.sflag [#allocation4], 1
    %12 = vsyncpa %s11, 0
    %13 = vsyncpa [#allocation6], 0
    loop: start=0, step=1, limit=4
    $region2: #{tpu_custom_call.1} parent=1 // loop_pre_header
      _
    $region3: #{tpu_custom_call.1} parent=1 // loop_header
      %s15 = sphi 0, %s19
      %p16 = scmp.ge.s32.totalorder %s15, 4
      %s25 = sphi 0, %s27
      %s28 = sphi 0, %s25
      %s29 = sphi 0, %s28
      %s45 = sphi 0, %s29
      %s49 = sphi 0, %s49
      %s51 = sphi 0, %s49
      %s52 = sphi 0, %s51
      %s66 = sphi 0, %s52
      %s70 = sphi 0, %s70
      %s72 = sphi 0, %s70
      %s73 = sphi 0, %s72
      %s87 = sphi 0, %s73
      %s93 = sphi 0, %s95
      %s96 = sphi 0, %s93
      %s97 = sphi 0, %s96
      %s113 = sphi 0, %s97
    $region4: #{tpu_custom_call.1} parent=1 // loop_header_branch
      %18 = sbr.rel (%p16) target = $region8
    $region5: #{tpu_custom_call.1} parent=1 // loop_body
      %s20 = ssub.s32 %s15, 1
      %s21 = ssub.s32 %s15, 2
      %s22 = sadd.s32 %s15, 1
      %s23 = ssub.s32 %s15, %s22
      %p24 = scmp.eq.s32.totalorder %s23, 0
      %s26 = sadd.s32 %s25, 1
      %s27 = scalar_select %p24, %s25, %s26
      %p30 = pneg %p24
      %p31 = scmp.eq.s32.totalorder %s15, 1
      %p32 = por %p30, %p31
      %p33 = scmp.ne.s32.totalorder %s25, %s28
      %p34 = scmp.eq.s32.totalorder %s15, 0
      %p35 = por %p33, %p34
      %p36 = scmp.ne.s32.totalorder %s25, %s28
      %p37 = scmp.eq.s32.totalorder %s20, 1
      %p38 = por %p36, %p37
      %p39 = scmp.ne.s32.totalorder %s28, %s29
      %p40 = scmp.eq.s32.totalorder %s20, 0
      %p41 = por %p39, %p40
      %p42 = scmp.ne.s32.totalorder %s28, %s29
      %p43 = scmp.eq.s32.totalorder %s21, 1
      %p44 = por %p42, %p43
      %p46 = scmp.ne.s32.totalorder %s29, %s45
      %p47 = scmp.eq.s32.totalorder %s21, 0
      %p48 = por %p46, %p47
      %s50 = sadd.s32 %s49, 1
      %p53 = scmp.eq.s32.totalorder %s15, 1
      %p54 = scmp.ne.s32.totalorder %s49, %s51
      %p55 = scmp.eq.s32.totalorder %s15, 0
      %p56 = por %p54, %p55
      %p57 = scmp.ne.s32.totalorder %s49, %s51
      %p58 = scmp.eq.s32.totalorder %s20, 1
      %p59 = por %p57, %p58
      %p60 = scmp.ne.s32.totalorder %s51, %s52
      %p61 = scmp.eq.s32.totalorder %s20, 0
      %p62 = por %p60, %p61
      %p63 = scmp.ne.s32.totalorder %s51, %s52
      %p64 = scmp.eq.s32.totalorder %s21, 1
      %p65 = por %p63, %p64
      %p67 = scmp.ne.s32.totalorder %s52, %s66
      %p68 = scmp.eq.s32.totalorder %s21, 0
      %p69 = por %p67, %p68
      %s71 = sadd.s32 %s70, 1
      %p74 = scmp.eq.s32.totalorder %s15, 1
      %p75 = scmp.ne.s32.totalorder %s70, %s72
      %p76 = scmp.eq.s32.totalorder %s15, 0
      %p77 = por %p75, %p76
      %p78 = scmp.ne.s32.totalorder %s70, %s72
      %p79 = scmp.eq.s32.totalorder %s20, 1
      %p80 = por %p78, %p79
      %p81 = scmp.ne.s32.totalorder %s72, %s73
      %p82 = scmp.eq.s32.totalorder %s20, 0
      %p83 = por %p81, %p82
      %p84 = scmp.ne.s32.totalorder %s72, %s73
      %p85 = scmp.eq.s32.totalorder %s21, 1
      %p86 = por %p84, %p85
      %p88 = scmp.ne.s32.totalorder %s73, %s87
      %p89 = scmp.eq.s32.totalorder %s21, 0
      %p90 = por %p88, %p89
      %s91 = ssub.s32 %s15, %s22
      %p92 = scmp.eq.s32.totalorder %s91, 0
      %s94 = sadd.s32 %s93, 1
      %s95 = scalar_select %p92, %s93, %s94
      %p98 = pneg %p92
      %p99 = scmp.eq.s32.totalorder %s15, 1
      %p100 = por %p98, %p99
      %p101 = scmp.ne.s32.totalorder %s93, %s96
      %p102 = scmp.eq.s32.totalorder %s15, 0
      %p103 = por %p101, %p102
      %p104 = scmp.ne.s32.totalorder %s93, %s96
      %p105 = scmp.eq.s32.totalorder %s20, 1
      %p106 = por %p104, %p105
      %p107 = scmp.ne.s32.totalorder %s96, %s97
      %p108 = scmp.eq.s32.totalorder %s20, 0
      %p109 = por %p107, %p108
      %p110 = scmp.ne.s32.totalorder %s96, %s97
      %p111 = scmp.eq.s32.totalorder %s21, 1
      %p112 = por %p110, %p111
      %p114 = scmp.ne.s32.totalorder %s97, %s113
      %p115 = scmp.eq.s32.totalorder %s21, 0
      %p116 = por %p114, %p115
      %p117 = scmp.le.s32.totalorder 1, %s15
      %p118 = scmp.lt.s32.totalorder %s15, 3
      %p119 = pnand %p117, %p118
      %p120 = pneg %p119
      // Predicated region
      $region9: #{tpu_custom_call.1} parent=5 // pred_check
        _
      $region10: #{tpu_custom_call.1} parent=5 // pred_check_branch
        %122 = sbr.rel (%p119) target = $region12
      $region11: #{tpu_custom_call.1} parent=5 // pred_region
        %s123 = ssub.s32 %s15, 1
        // Predicated region
        $region13: #{tpu_custom_call.1} parent=11 // pred_check
          %p124 = pneg %p62
        $region14: #{tpu_custom_call.1} parent=11 // pred_check_branch
          %126 = sbr.rel (%p124) target = $region16
        $region15: #{tpu_custom_call.1} parent=11 // pred_region
          %s128 = ssub.s32 512, 512
          %129 = vsyncadd [#allocation6], %s128
          %s131 = sshll.u32 [#allocation5], 4
          %s132 = int_to_ptr.vmem [resolvable:$true] %s131
          %134 = dma.hbm_to_vmem [thread:$0]  %s1, 512, %s132, [#allocation6]
        $region16: #{tpu_custom_call.1} parent=11 // pred_fallthru
          _
        // Predicated region
        $region17: #{tpu_custom_call.1} parent=11 // pred_check
          %p135 = pneg %p83
        $region18: #{tpu_custom_call.1} parent=11 // pred_check_branch
          %137 = sbr.rel (%p135) target = $region20
        $region19: #{tpu_custom_call.1} parent=11 // pred_region
          _
        $region20: #{tpu_custom_call.1} parent=11 // pred_fallthru
          _
      $region12: #{tpu_custom_call.1} parent=5 // pred_fallthru
        _
      %p138 = scmp.lt.s32.totalorder %s15, 2
      // Predicated region
      $region21: #{tpu_custom_call.1} parent=5 // pred_check
        %p139 = pneg %p138
      $region22: #{tpu_custom_call.1} parent=5 // pred_check_branch
        %141 = sbr.rel (%p139) target = $region24
      $region23: #{tpu_custom_call.1} parent=5 // pred_region
        // Predicated region
        $region25: #{tpu_custom_call.1} parent=23 // pred_check
          %p142 = pneg %p35
        $region26: #{tpu_custom_call.1} parent=23 // pred_check_branch
          %144 = sbr.rel (%p142) target = $region28
        $region27: #{tpu_custom_call.1} parent=23 // pred_region
          %s145 = sand.u32 %s25, 1
          %s146 = scalar_lea.sflag [#allocation4], %s145
          %s147 = sand.u32 %s25, 1
          %s148 = smul.addr %s147, 2048
          %s149 = scalar_lea.vmem [#allocation3], %s148
          %s150 = smul.u32 8, %s15
          %s152 = ssub.s32 32768, 32768
          %153 = vsyncadd %s146, %s152
          %s154 = smul.addr %s150, 32
          %s155 = smul.addr %s154, 128
          %s156 = scalar_lea.hbm %s0, %s155
          %s157 = sshll.u32 %s149, 4
          %s158 = int_to_ptr.vmem [resolvable:$true] %s157
          %163 = dma.hbm_to_vmem [thread:$0]  %s156, 32768, %s158, %s146, 4096, 4096, 256
        $region28: #{tpu_custom_call.1} parent=23 // pred_fallthru
          _
      $region24: #{tpu_custom_call.1} parent=5 // pred_fallthru
        _
      %p164 = scmp.le.s32.totalorder 1, %s15
      %p165 = scmp.lt.s32.totalorder %s15, 3
      %p166 = pnand %p164, %p165
      %p167 = pneg %p166
      // Predicated region
      $region29: #{tpu_custom_call.1} parent=5 // pred_check
        _
      $region30: #{tpu_custom_call.1} parent=5 // pred_check_branch
        %169 = sbr.rel (%p166) target = $region32
      $region31: #{tpu_custom_call.1} parent=5 // pred_region
        %s170 = ssub.s32 %s15, 1
        %s171 = sand.u32 %s28, 1
        %s172 = scalar_lea.sflag [#allocation4], %s171
        %s173 = sand.u32 %s28, 1
        %s174 = smul.addr %s173, 2048
        %s175 = scalar_lea.vmem [#allocation3], %s174
        // Predicated region
        $region33: #{tpu_custom_call.1} parent=31 // pred_check
          %p176 = pneg %p41
        $region34: #{tpu_custom_call.1} parent=31 // pred_check_branch
          %178 = sbr.rel (%p176) target = $region36
        $region35: #{tpu_custom_call.1} parent=31 // pred_region
          %179 = dma.done %s172, 32768
        $region36: #{tpu_custom_call.1} parent=31 // pred_fallthru
          _
        // Predicated region
        $region37: #{tpu_custom_call.1} parent=31 // pred_check
          %p180 = pneg %p62
        $region38: #{tpu_custom_call.1} parent=31 // pred_check_branch
          %182 = sbr.rel (%p180) target = $region40
        $region39: #{tpu_custom_call.1} parent=31 // pred_region
          %183 = dma.done [#allocation6], 512
        $region40: #{tpu_custom_call.1} parent=31 // pred_fallthru
          _
        %s184 = sand.u32 %s28, 1
        %s185 = scalar_lea.sflag [#allocation4], %s184
        %s186 = sand.u32 %s28, 1
        %s187 = smul.addr %s186, 2048
        %s188 = scalar_lea.vmem [#allocation3], %s187
        %p189 = pneg %p41
        %p190 = pneg %p38
        %p191 = pneg %p62
        %p192 = pneg %p59
        %p193 = pneg %p83
        %p194 = pneg %p80
        %p195 = pneg %p109
        %p196 = pneg %p106
        %s197 = smul.u32 8, %s20
        %p198 = scmp.lt.s32.totalorder %s197, 15
        %s199 = scalar_select %p198, %s197, 15
        %s200 = smul.addr %s199, 8
        %s201 = scalar_lea.vmem %s3, %s200
        %s202 = smul.u32 8, %s20
        %s203 = smul.u32 8, %s20
        %p204 = scmp.lt.s32.totalorder %s203, 15
        %s205 = scalar_select %p204, %s203, 15
        %s206 = smul.addr %s205, 8
        %s207 = scalar_lea.vmem %s3, %s206
        %s208 = smul.u32 8, %s20
        %v209 = vld [vmem:[%s175] sm:$0xff]
        %v210 = vld [vmem:[%s175 + $0x8] sm:$0xff]
        %v211 = vld [vmem:[%s175 + $0x10] sm:$0xff]
        %v212 = vld [vmem:[%s175 + $0x18] sm:$0xff]
        %v213 = vld [vmem:[%s175 + $0x20] sm:$0xff]
        %v214 = vld [vmem:[%s175 + $0x28] sm:$0xff]
        %v215 = vld [vmem:[%s175 + $0x30] sm:$0xff]
        %v216 = vld [vmem:[%s175 + $0x38] sm:$0xff]
        %v217 = vld [vmem:[%s175 + $0x40] sm:$0xff]
        %v218 = vld [vmem:[%s175 + $0x48] sm:$0xff]
        %v219 = vld [vmem:[%s175 + $0x50] sm:$0xff]
        %v220 = vld [vmem:[%s175 + $0x58] sm:$0xff]
        %v221 = vld [vmem:[%s175 + $0x60] sm:$0xff]
        %v222 = vld [vmem:[%s175 + $0x68] sm:$0xff]
        %v223 = vld [vmem:[%s175 + $0x70] sm:$0xff]
        %v224 = vld [vmem:[%s175 + $0x78] sm:$0xff]
        %v225 = vld [vmem:[%s175 + $0x80] sm:$0xff]
        %v226 = vld [vmem:[%s175 + $0x88] sm:$0xff]
        %v227 = vld [vmem:[%s175 + $0x90] sm:$0xff]
        %v228 = vld [vmem:[%s175 + $0x98] sm:$0xff]
        %v229 = vld [vmem:[%s175 + $0xa0] sm:$0xff]
        %v230 = vld [vmem:[%s175 + $0xa8] sm:$0xff]
        %v231 = vld [vmem:[%s175 + $0xb0] sm:$0xff]
        %v232 = vld [vmem:[%s175 + $0xb8] sm:$0xff]
        %v233 = vld [vmem:[%s175 + $0xc0] sm:$0xff]
        %v234 = vld [vmem:[%s175 + $0xc8] sm:$0xff]
        %v235 = vld [vmem:[%s175 + $0xd0] sm:$0xff]
        %v236 = vld [vmem:[%s175 + $0xd8] sm:$0xff]
        %v237 = vld [vmem:[%s175 + $0xe0] sm:$0xff]
        %v238 = vld [vmem:[%s175 + $0xe8] sm:$0xff]
        %v239 = vld [vmem:[%s175 + $0xf0] sm:$0xff]
        %v240 = vld [vmem:[%s175 + $0xf8] sm:$0xff]
        %v241 = vld [vmem:[%s175 + $0x100] sm:$0xff]
        %v242 = vld [vmem:[%s175 + $0x108] sm:$0xff]
        %v243 = vld [vmem:[%s175 + $0x110] sm:$0xff]
        %v244 = vld [vmem:[%s175 + $0x118] sm:$0xff]
        %v245 = vld [vmem:[%s175 + $0x120] sm:$0xff]
        %v246 = vld [vmem:[%s175 + $0x128] sm:$0xff]
        %v247 = vld [vmem:[%s175 + $0x130] sm:$0xff]
        %v248 = vld [vmem:[%s175 + $0x138] sm:$0xff]
        %v249 = vld [vmem:[%s175 + $0x140] sm:$0xff]
        %v250 = vld [vmem:[%s175 + $0x148] sm:$0xff]
        %v251 = vld [vmem:[%s175 + $0x150] sm:$0xff]
        %v252 = vld [vmem:[%s175 + $0x158] sm:$0xff]
        %v253 = vld [vmem:[%s175 + $0x160] sm:$0xff]
        %v254 = vld [vmem:[%s175 + $0x168] sm:$0xff]
        %v255 = vld [vmem:[%s175 + $0x170] sm:$0xff]
        %v256 = vld [vmem:[%s175 + $0x178] sm:$0xff]
        %v257 = vld [vmem:[%s175 + $0x180] sm:$0xff]
        %v258 = vld [vmem:[%s175 + $0x188] sm:$0xff]
        %v259 = vld [vmem:[%s175 + $0x190] sm:$0xff]
        %v260 = vld [vmem:[%s175 + $0x198] sm:$0xff]
        %v261 = vld [vmem:[%s175 + $0x1a0] sm:$0xff]
        %v262 = vld [vmem:[%s175 + $0x1a8] sm:$0xff]
        %v263 = vld [vmem:[%s175 + $0x1b0] sm:$0xff]
        %v264 = vld [vmem:[%s175 + $0x1b8] sm:$0xff]
        %v265 = vld [vmem:[%s175 + $0x1c0] sm:$0xff]
        %v266 = vld [vmem:[%s175 + $0x1c8] sm:$0xff]
        %v267 = vld [vmem:[%s175 + $0x1d0] sm:$0xff]
        %v268 = vld [vmem:[%s175 + $0x1d8] sm:$0xff]
        %v269 = vld [vmem:[%s175 + $0x1e0] sm:$0xff]
        %v270 = vld [vmem:[%s175 + $0x1e8] sm:$0xff]
        %v271 = vld [vmem:[%s175 + $0x1f0] sm:$0xff]
        %v272 = vld [vmem:[%s175 + $0x1f8] sm:$0xff]
        %v273 = vld [vmem:[%s175 + $0x200] sm:$0xff]
        %v274 = vld [vmem:[%s175 + $0x208] sm:$0xff]
        %v275 = vld [vmem:[%s175 + $0x210] sm:$0xff]
        %v276 = vld [vmem:[%s175 + $0x218] sm:$0xff]
        %v277 = vld [vmem:[%s175 + $0x220] sm:$0xff]
        %v278 = vld [vmem:[%s175 + $0x228] sm:$0xff]
        %v279 = vld [vmem:[%s175 + $0x230] sm:$0xff]
        %v280 = vld [vmem:[%s175 + $0x238] sm:$0xff]
        %v281 = vld [vmem:[%s175 + $0x240] sm:$0xff]
        %v282 = vld [vmem:[%s175 + $0x248] sm:$0xff]
        %v283 = vld [vmem:[%s175 + $0x250] sm:$0xff]
        %v284 = vld [vmem:[%s175 + $0x258] sm:$0xff]
        %v285 = vld [vmem:[%s175 + $0x260] sm:$0xff]
        %v286 = vld [vmem:[%s175 + $0x268] sm:$0xff]
        %v287 = vld [vmem:[%s175 + $0x270] sm:$0xff]
        %v288 = vld [vmem:[%s175 + $0x278] sm:$0xff]
        %v289 = vld [vmem:[%s175 + $0x280] sm:$0xff]
        %v290 = vld [vmem:[%s175 + $0x288] sm:$0xff]
        %v291 = vld [vmem:[%s175 + $0x290] sm:$0xff]
        %v292 = vld [vmem:[%s175 + $0x298] sm:$0xff]
        %v293 = vld [vmem:[%s175 + $0x2a0] sm:$0xff]
        %v294 = vld [vmem:[%s175 + $0x2a8] sm:$0xff]
        %v295 = vld [vmem:[%s175 + $0x2b0] sm:$0xff]
        %v296 = vld [vmem:[%s175 + $0x2b8] sm:$0xff]
        %v297 = vld [vmem:[%s175 + $0x2c0] sm:$0xff]
        %v298 = vld [vmem:[%s175 + $0x2c8] sm:$0xff]
        %v299 = vld [vmem:[%s175 + $0x2d0] sm:$0xff]
        %v300 = vld [vmem:[%s175 + $0x2d8] sm:$0xff]
        %v301 = vld [vmem:[%s175 + $0x2e0] sm:$0xff]
        %v302 = vld [vmem:[%s175 + $0x2e8] sm:$0xff]
        %v303 = vld [vmem:[%s175 + $0x2f0] sm:$0xff]
        %v304 = vld [vmem:[%s175 + $0x2f8] sm:$0xff]
        %v305 = vld [vmem:[%s175 + $0x300] sm:$0xff]
        %v306 = vld [vmem:[%s175 + $0x308] sm:$0xff]
        %v307 = vld [vmem:[%s175 + $0x310] sm:$0xff]
        %v308 = vld [vmem:[%s175 + $0x318] sm:$0xff]
        %v309 = vld [vmem:[%s175 + $0x320] sm:$0xff]
        %v310 = vld [vmem:[%s175 + $0x328] sm:$0xff]
        %v311 = vld [vmem:[%s175 + $0x330] sm:$0xff]
        %v312 = vld [vmem:[%s175 + $0x338] sm:$0xff]
        %v313 = vld [vmem:[%s175 + $0x340] sm:$0xff]
        %v314 = vld [vmem:[%s175 + $0x348] sm:$0xff]
        %v315 = vld [vmem:[%s175 + $0x350] sm:$0xff]
        %v316 = vld [vmem:[%s175 + $0x358] sm:$0xff]
        %v317 = vld [vmem:[%s175 + $0x360] sm:$0xff]
        %v318 = vld [vmem:[%s175 + $0x368] sm:$0xff]
        %v319 = vld [vmem:[%s175 + $0x370] sm:$0xff]
        %v320 = vld [vmem:[%s175 + $0x378] sm:$0xff]
        %v321 = vld [vmem:[%s175 + $0x380] sm:$0xff]
        %v322 = vld [vmem:[%s175 + $0x388] sm:$0xff]
        %v323 = vld [vmem:[%s175 + $0x390] sm:$0xff]
        %v324 = vld [vmem:[%s175 + $0x398] sm:$0xff]
        %v325 = vld [vmem:[%s175 + $0x3a0] sm:$0xff]
        %v326 = vld [vmem:[%s175 + $0x3a8] sm:$0xff]
        %v327 = vld [vmem:[%s175 + $0x3b0] sm:$0xff]
        %v328 = vld [vmem:[%s175 + $0x3b8] sm:$0xff]
        %v329 = vld [vmem:[%s175 + $0x3c0] sm:$0xff]
        %v330 = vld [vmem:[%s175 + $0x3c8] sm:$0xff]
        %v331 = vld [vmem:[%s175 + $0x3d0] sm:$0xff]
        %v332 = vld [vmem:[%s175 + $0x3d8] sm:$0xff]
        %v333 = vld [vmem:[%s175 + $0x3e0] sm:$0xff]
        %v334 = vld [vmem:[%s175 + $0x3e8] sm:$0xff]
        %v335 = vld [vmem:[%s175 + $0x3f0] sm:$0xff]
        %v336 = vld [vmem:[%s175 + $0x3f8] sm:$0xff]
        %v337 = vld [vmem:[%s175 + $0x400] sm:$0xff]
        %v338 = vld [vmem:[%s175 + $0x408] sm:$0xff]
        %v339 = vld [vmem:[%s175 + $0x410] sm:$0xff]
        %v340 = vld [vmem:[%s175 + $0x418] sm:$0xff]
        %v341 = vld [vmem:[%s175 + $0x420] sm:$0xff]
        %v342 = vld [vmem:[%s175 + $0x428] sm:$0xff]
        %v343 = vld [vmem:[%s175 + $0x430] sm:$0xff]
        %v344 = vld [vmem:[%s175 + $0x438] sm:$0xff]
        %v345 = vld [vmem:[%s175 + $0x440] sm:$0xff]
        %v346 = vld [vmem:[%s175 + $0x448] sm:$0xff]
        %v347 = vld [vmem:[%s175 + $0x450] sm:$0xff]
        %v348 = vld [vmem:[%s175 + $0x458] sm:$0xff]
        %v349 = vld [vmem:[%s175 + $0x460] sm:$0xff]
        %v350 = vld [vmem:[%s175 + $0x468] sm:$0xff]
        %v351 = vld [vmem:[%s175 + $0x470] sm:$0xff]
        %v352 = vld [vmem:[%s175 + $0x478] sm:$0xff]
        %v353 = vld [vmem:[%s175 + $0x480] sm:$0xff]
        %v354 = vld [vmem:[%s175 + $0x488] sm:$0xff]
        %v355 = vld [vmem:[%s175 + $0x490] sm:$0xff]
        %v356 = vld [vmem:[%s175 + $0x498] sm:$0xff]
        %v357 = vld [vmem:[%s175 + $0x4a0] sm:$0xff]
        %v358 = vld [vmem:[%s175 + $0x4a8] sm:$0xff]
        %v359 = vld [vmem:[%s175 + $0x4b0] sm:$0xff]
        %v360 = vld [vmem:[%s175 + $0x4b8] sm:$0xff]
        %v361 = vld [vmem:[%s175 + $0x4c0] sm:$0xff]
        %v362 = vld [vmem:[%s175 + $0x4c8] sm:$0xff]
        %v363 = vld [vmem:[%s175 + $0x4d0] sm:$0xff]
        %v364 = vld [vmem:[%s175 + $0x4d8] sm:$0xff]
        %v365 = vld [vmem:[%s175 + $0x4e0] sm:$0xff]
        %v366 = vld [vmem:[%s175 + $0x4e8] sm:$0xff]
        %v367 = vld [vmem:[%s175 + $0x4f0] sm:$0xff]
        %v368 = vld [vmem:[%s175 + $0x4f8] sm:$0xff]
        %v369 = vld [vmem:[%s175 + $0x500] sm:$0xff]
        %v370 = vld [vmem:[%s175 + $0x508] sm:$0xff]
        %v371 = vld [vmem:[%s175 + $0x510] sm:$0xff]
        %v372 = vld [vmem:[%s175 + $0x518] sm:$0xff]
        %v373 = vld [vmem:[%s175 + $0x520] sm:$0xff]
        %v374 = vld [vmem:[%s175 + $0x528] sm:$0xff]
        %v375 = vld [vmem:[%s175 + $0x530] sm:$0xff]
        %v376 = vld [vmem:[%s175 + $0x538] sm:$0xff]
        %v377 = vld [vmem:[%s175 + $0x540] sm:$0xff]
        %v378 = vld [vmem:[%s175 + $0x548] sm:$0xff]
        %v379 = vld [vmem:[%s175 + $0x550] sm:$0xff]
        %v380 = vld [vmem:[%s175 + $0x558] sm:$0xff]
        %v381 = vld [vmem:[%s175 + $0x560] sm:$0xff]
        %v382 = vld [vmem:[%s175 + $0x568] sm:$0xff]
        %v383 = vld [vmem:[%s175 + $0x570] sm:$0xff]
        %v384 = vld [vmem:[%s175 + $0x578] sm:$0xff]
        %v385 = vld [vmem:[%s175 + $0x580] sm:$0xff]
        %v386 = vld [vmem:[%s175 + $0x588] sm:$0xff]
        %v387 = vld [vmem:[%s175 + $0x590] sm:$0xff]
        %v388 = vld [vmem:[%s175 + $0x598] sm:$0xff]
        %v389 = vld [vmem:[%s175 + $0x5a0] sm:$0xff]
        %v390 = vld [vmem:[%s175 + $0x5a8] sm:$0xff]
        %v391 = vld [vmem:[%s175 + $0x5b0] sm:$0xff]
        %v392 = vld [vmem:[%s175 + $0x5b8] sm:$0xff]
        %v393 = vld [vmem:[%s175 + $0x5c0] sm:$0xff]
        %v394 = vld [vmem:[%s175 + $0x5c8] sm:$0xff]
        %v395 = vld [vmem:[%s175 + $0x5d0] sm:$0xff]
        %v396 = vld [vmem:[%s175 + $0x5d8] sm:$0xff]
        %v397 = vld [vmem:[%s175 + $0x5e0] sm:$0xff]
        %v398 = vld [vmem:[%s175 + $0x5e8] sm:$0xff]
        %v399 = vld [vmem:[%s175 + $0x5f0] sm:$0xff]
        %v400 = vld [vmem:[%s175 + $0x5f8] sm:$0xff]
        %v401 = vld [vmem:[%s175 + $0x600] sm:$0xff]
        %v402 = vld [vmem:[%s175 + $0x608] sm:$0xff]
        %v403 = vld [vmem:[%s175 + $0x610] sm:$0xff]
        %v404 = vld [vmem:[%s175 + $0x618] sm:$0xff]
        %v405 = vld [vmem:[%s175 + $0x620] sm:$0xff]
        %v406 = vld [vmem:[%s175 + $0x628] sm:$0xff]
        %v407 = vld [vmem:[%s175 + $0x630] sm:$0xff]
        %v408 = vld [vmem:[%s175 + $0x638] sm:$0xff]
        %v409 = vld [vmem:[%s175 + $0x640] sm:$0xff]
        %v410 = vld [vmem:[%s175 + $0x648] sm:$0xff]
        %v411 = vld [vmem:[%s175 + $0x650] sm:$0xff]
        %v412 = vld [vmem:[%s175 + $0x658] sm:$0xff]
        %v413 = vld [vmem:[%s175 + $0x660] sm:$0xff]
        %v414 = vld [vmem:[%s175 + $0x668] sm:$0xff]
        %v415 = vld [vmem:[%s175 + $0x670] sm:$0xff]
        %v416 = vld [vmem:[%s175 + $0x678] sm:$0xff]
        %v417 = vld [vmem:[%s175 + $0x680] sm:$0xff]
        %v418 = vld [vmem:[%s175 + $0x688] sm:$0xff]
        %v419 = vld [vmem:[%s175 + $0x690] sm:$0xff]
        %v420 = vld [vmem:[%s175 + $0x698] sm:$0xff]
        %v421 = vld [vmem:[%s175 + $0x6a0] sm:$0xff]
        %v422 = vld [vmem:[%s175 + $0x6a8] sm:$0xff]
        %v423 = vld [vmem:[%s175 + $0x6b0] sm:$0xff]
        %v424 = vld [vmem:[%s175 + $0x6b8] sm:$0xff]
        %v425 = vld [vmem:[%s175 + $0x6c0] sm:$0xff]
        %v426 = vld [vmem:[%s175 + $0x6c8] sm:$0xff]
        %v427 = vld [vmem:[%s175 + $0x6d0] sm:$0xff]
        %v428 = vld [vmem:[%s175 + $0x6d8] sm:$0xff]
        %v429 = vld [vmem:[%s175 + $0x6e0] sm:$0xff]
        %v430 = vld [vmem:[%s175 + $0x6e8] sm:$0xff]
        %v431 = vld [vmem:[%s175 + $0x6f0] sm:$0xff]
        %v432 = vld [vmem:[%s175 + $0x6f8] sm:$0xff]
        %v433 = vld [vmem:[%s175 + $0x700] sm:$0xff]
        %v434 = vld [vmem:[%s175 + $0x708] sm:$0xff]
        %v435 = vld [vmem:[%s175 + $0x710] sm:$0xff]
        %v436 = vld [vmem:[%s175 + $0x718] sm:$0xff]
        %v437 = vld [vmem:[%s175 + $0x720] sm:$0xff]
        %v438 = vld [vmem:[%s175 + $0x728] sm:$0xff]
        %v439 = vld [vmem:[%s175 + $0x730] sm:$0xff]
        %v440 = vld [vmem:[%s175 + $0x738] sm:$0xff]
        %v441 = vld [vmem:[%s175 + $0x740] sm:$0xff]
        %v442 = vld [vmem:[%s175 + $0x748] sm:$0xff]
        %v443 = vld [vmem:[%s175 + $0x750] sm:$0xff]
        %v444 = vld [vmem:[%s175 + $0x758] sm:$0xff]
        %v445 = vld [vmem:[%s175 + $0x760] sm:$0xff]
        %v446 = vld [vmem:[%s175 + $0x768] sm:$0xff]
        %v447 = vld [vmem:[%s175 + $0x770] sm:$0xff]
        %v448 = vld [vmem:[%s175 + $0x778] sm:$0xff]
        %v449 = vld [vmem:[%s175 + $0x780] sm:$0xff]
        %v450 = vld [vmem:[%s175 + $0x788] sm:$0xff]
        %v451 = vld [vmem:[%s175 + $0x790] sm:$0xff]
        %v452 = vld [vmem:[%s175 + $0x798] sm:$0xff]
        %v453 = vld [vmem:[%s175 + $0x7a0] sm:$0xff]
        %v454 = vld [vmem:[%s175 + $0x7a8] sm:$0xff]
        %v455 = vld [vmem:[%s175 + $0x7b0] sm:$0xff]
        %v456 = vld [vmem:[%s175 + $0x7b8] sm:$0xff]
        %v457 = vld [vmem:[%s175 + $0x7c0] sm:$0xff]
        %v458 = vld [vmem:[%s175 + $0x7c8] sm:$0xff]
        %v459 = vld [vmem:[%s175 + $0x7d0] sm:$0xff]
        %v460 = vld [vmem:[%s175 + $0x7d8] sm:$0xff]
        %v461 = vld [vmem:[%s175 + $0x7e0] sm:$0xff]
        %v462 = vld [vmem:[%s175 + $0x7e8] sm:$0xff]
        %v463 = vld [vmem:[%s175 + $0x7f0] sm:$0xff]
        %v464 = vld [vmem:[%s175 + $0x7f8] sm:$0xff]
        %v465 = vld [vmem:[#allocation5] sm:$0xff]
        %v466 = vld [vmem:[#allocation5 + $0x8] sm:$0xff]
        %v467 = vld [vmem:[#allocation5 + $0x10] sm:$0xff]
        %v468 = vld [vmem:[#allocation5 + $0x18] sm:$0xff]
        %v473 = vlaneseq
        %v474 = vshrl.u32 %v473, 7
        %v475 = vsub.s32 0, %v474
        %v476 = vrot.slane %v465, %v475
        %v477 = vlaneseq
        %v478 = vshrl.u32 %v477, 7
        %v479 = vsub.s32 1, %v478
        %v480 = vrot.slane %v465, %v479
        %v481 = vlaneseq
        %v482 = vshrl.u32 %v481, 7
        %v483 = vsub.s32 2, %v482
        %v484 = vrot.slane %v465, %v483
        %v485 = vlaneseq
        %v486 = vshrl.u32 %v485, 7
        %v487 = vsub.s32 3, %v486
        %v488 = vrot.slane %v465, %v487
        %v489 = vlaneseq
        %v490 = vshrl.u32 %v489, 7
        %v491 = vsub.s32 4, %v490
        %v492 = vrot.slane %v465, %v491
        %v493 = vlaneseq
        %v494 = vshrl.u32 %v493, 7
        %v495 = vsub.s32 5, %v494
        %v496 = vrot.slane %v465, %v495
        %v497 = vlaneseq
        %v498 = vshrl.u32 %v497, 7
        %v499 = vsub.s32 6, %v498
        %v500 = vrot.slane %v465, %v499
        %v501 = vlaneseq
        %v502 = vshrl.u32 %v501, 7
        %v503 = vsub.s32 7, %v502
        %v504 = vrot.slane %v465, %v503
        %v505 = vlaneseq
        %v506 = vshrl.u32 %v505, 7
        %v507 = vsub.s32 0, %v506
        %v508 = vrot.slane %v466, %v507
        %v509 = vlaneseq
        %v510 = vshrl.u32 %v509, 7
        %v511 = vsub.s32 1, %v510
        %v512 = vrot.slane %v466, %v511
        %v513 = vlaneseq
        %v514 = vshrl.u32 %v513, 7
        %v515 = vsub.s32 2, %v514
        %v516 = vrot.slane %v466, %v515
        %v517 = vlaneseq
        %v518 = vshrl.u32 %v517, 7
        %v519 = vsub.s32 3, %v518
        %v520 = vrot.slane %v466, %v519
        %v521 = vlaneseq
        %v522 = vshrl.u32 %v521, 7
        %v523 = vsub.s32 4, %v522
        %v524 = vrot.slane %v466, %v523
        %v525 = vlaneseq
        %v526 = vshrl.u32 %v525, 7
        %v527 = vsub.s32 5, %v526
        %v528 = vrot.slane %v466, %v527
        %v529 = vlaneseq
        %v530 = vshrl.u32 %v529, 7
        %v531 = vsub.s32 6, %v530
        %v532 = vrot.slane %v466, %v531
        %v533 = vlaneseq
        %v534 = vshrl.u32 %v533, 7
        %v535 = vsub.s32 7, %v534
        %v536 = vrot.slane %v466, %v535
        %v537 = vlaneseq
        %v538 = vshrl.u32 %v537, 7
        %v539 = vsub.s32 0, %v538
        %v540 = vrot.slane %v467, %v539
        %v541 = vlaneseq
        %v542 = vshrl.u32 %v541, 7
        %v543 = vsub.s32 1, %v542
        %v544 = vrot.slane %v467, %v543
        %v545 = vlaneseq
        %v546 = vshrl.u32 %v545, 7
        %v547 = vsub.s32 2, %v546
        %v548 = vrot.slane %v467, %v547
        %v549 = vlaneseq
        %v550 = vshrl.u32 %v549, 7
        %v551 = vsub.s32 3, %v550
        %v552 = vrot.slane %v467, %v551
        %v553 = vlaneseq
        %v554 = vshrl.u32 %v553, 7
        %v555 = vsub.s32 4, %v554
        %v556 = vrot.slane %v467, %v555
        %v557 = vlaneseq
        %v558 = vshrl.u32 %v557, 7
        %v559 = vsub.s32 5, %v558
        %v560 = vrot.slane %v467, %v559
        %v561 = vlaneseq
        %v562 = vshrl.u32 %v561, 7
        %v563 = vsub.s32 6, %v562
        %v564 = vrot.slane %v467, %v563
        %v565 = vlaneseq
        %v566 = vshrl.u32 %v565, 7
        %v567 = vsub.s32 7, %v566
        %v568 = vrot.slane %v467, %v567
        %v569 = vlaneseq
        %v570 = vshrl.u32 %v569, 7
        %v571 = vsub.s32 0, %v570
        %v572 = vrot.slane %v468, %v571
        %v573 = vlaneseq
        %v574 = vshrl.u32 %v573, 7
        %v575 = vsub.s32 1, %v574
        %v576 = vrot.slane %v468, %v575
        %v577 = vlaneseq
        %v578 = vshrl.u32 %v577, 7
        %v579 = vsub.s32 2, %v578
        %v580 = vrot.slane %v468, %v579
        %v581 = vlaneseq
        %v582 = vshrl.u32 %v581, 7
        %v583 = vsub.s32 3, %v582
        %v584 = vrot.slane %v468, %v583
        %v585 = vlaneseq
        %v586 = vshrl.u32 %v585, 7
        %v587 = vsub.s32 4, %v586
        %v588 = vrot.slane %v468, %v587
        %v589 = vlaneseq
        %v590 = vshrl.u32 %v589, 7
        %v591 = vsub.s32 5, %v590
        %v592 = vrot.slane %v468, %v591
        %v593 = vlaneseq
        %v594 = vshrl.u32 %v593, 7
        %v595 = vsub.s32 6, %v594
        %v596 = vrot.slane %v468, %v595
        %v597 = vlaneseq
        %v598 = vshrl.u32 %v597, 7
        %v599 = vsub.s32 7, %v598
        %v600 = vrot.slane %v468, %v599
        %v633 = vmul.f32 %v209, %v476
        %v634 = vmul.f32 %v210, %v480
        %v635 = vmul.f32 %v211, %v484
        %v636 = vmul.f32 %v212, %v488
        %v637 = vmul.f32 %v213, %v492
        %v638 = vmul.f32 %v214, %v496
        %v639 = vmul.f32 %v215, %v500
        %v640 = vmul.f32 %v216, %v504
        %v641 = vmul.f32 %v217, %v508
        %v642 = vmul.f32 %v218, %v512
        %v643 = vmul.f32 %v219, %v516
        %v644 = vmul.f32 %v220, %v520
        %v645 = vmul.f32 %v221, %v524
        %v646 = vmul.f32 %v222, %v528
        %v647 = vmul.f32 %v223, %v532
        %v648 = vmul.f32 %v224, %v536
        %v649 = vmul.f32 %v225, %v540
        %v650 = vmul.f32 %v226, %v544
        %v651 = vmul.f32 %v227, %v548
        %v652 = vmul.f32 %v228, %v552
        %v653 = vmul.f32 %v229, %v556
        %v654 = vmul.f32 %v230, %v560
        %v655 = vmul.f32 %v231, %v564
        %v656 = vmul.f32 %v232, %v568
        %v657 = vmul.f32 %v233, %v572
        %v658 = vmul.f32 %v234, %v576
        %v659 = vmul.f32 %v235, %v580
        %v660 = vmul.f32 %v236, %v584
        %v661 = vmul.f32 %v237, %v588
        %v662 = vmul.f32 %v238, %v592
        %v663 = vmul.f32 %v239, %v596
        %v664 = vmul.f32 %v240, %v600
        %v665 = vmul.f32 %v241, %v476
        %v666 = vmul.f32 %v242, %v480
        %v667 = vmul.f32 %v243, %v484
        %v668 = vmul.f32 %v244, %v488
        %v669 = vmul.f32 %v245, %v492
        %v670 = vmul.f32 %v246, %v496
        %v671 = vmul.f32 %v247, %v500
        %v672 = vmul.f32 %v248, %v504
        %v673 = vmul.f32 %v249, %v508
        %v674 = vmul.f32 %v250, %v512
        %v675 = vmul.f32 %v251, %v516
        %v676 = vmul.f32 %v252, %v520
        %v677 = vmul.f32 %v253, %v524
        %v678 = vmul.f32 %v254, %v528
        %v679 = vmul.f32 %v255, %v532
        %v680 = vmul.f32 %v256, %v536
        %v681 = vmul.f32 %v257, %v540
        %v682 = vmul.f32 %v258, %v544
        %v683 = vmul.f32 %v259, %v548
        %v684 = vmul.f32 %v260, %v552
        %v685 = vmul.f32 %v261, %v556
        %v686 = vmul.f32 %v262, %v560
        %v687 = vmul.f32 %v263, %v564
        %v688 = vmul.f32 %v264, %v568
        %v689 = vmul.f32 %v265, %v572
        %v690 = vmul.f32 %v266, %v576
        %v691 = vmul.f32 %v267, %v580
        %v692 = vmul.f32 %v268, %v584
        %v693 = vmul.f32 %v269, %v588
        %v694 = vmul.f32 %v270, %v592
        %v695 = vmul.f32 %v271, %v596
        %v696 = vmul.f32 %v272, %v600
        %v697 = vmul.f32 %v273, %v476
        %v698 = vmul.f32 %v274, %v480
        %v699 = vmul.f32 %v275, %v484
        %v700 = vmul.f32 %v276, %v488
        %v701 = vmul.f32 %v277, %v492
        %v702 = vmul.f32 %v278, %v496
        %v703 = vmul.f32 %v279, %v500
        %v704 = vmul.f32 %v280, %v504
        %v705 = vmul.f32 %v281, %v508
        %v706 = vmul.f32 %v282, %v512
        %v707 = vmul.f32 %v283, %v516
        %v708 = vmul.f32 %v284, %v520
        %v709 = vmul.f32 %v285, %v524
        %v710 = vmul.f32 %v286, %v528
        %v711 = vmul.f32 %v287, %v532
        %v712 = vmul.f32 %v288, %v536
        %v713 = vmul.f32 %v289, %v540
        %v714 = vmul.f32 %v290, %v544
        %v715 = vmul.f32 %v291, %v548
        %v716 = vmul.f32 %v292, %v552
        %v717 = vmul.f32 %v293, %v556
        %v718 = vmul.f32 %v294, %v560
        %v719 = vmul.f32 %v295, %v564
        %v720 = vmul.f32 %v296, %v568
        %v721 = vmul.f32 %v297, %v572
        %v722 = vmul.f32 %v298, %v576
        %v723 = vmul.f32 %v299, %v580
        %v724 = vmul.f32 %v300, %v584
        %v725 = vmul.f32 %v301, %v588
        %v726 = vmul.f32 %v302, %v592
        %v727 = vmul.f32 %v303, %v596
        %v728 = vmul.f32 %v304, %v600
        %v729 = vmul.f32 %v305, %v476
        %v730 = vmul.f32 %v306, %v480
        %v731 = vmul.f32 %v307, %v484
        %v732 = vmul.f32 %v308, %v488
        %v733 = vmul.f32 %v309, %v492
        %v734 = vmul.f32 %v310, %v496
        %v735 = vmul.f32 %v311, %v500
        %v736 = vmul.f32 %v312, %v504
        %v737 = vmul.f32 %v313, %v508
        %v738 = vmul.f32 %v314, %v512
        %v739 = vmul.f32 %v315, %v516
        %v740 = vmul.f32 %v316, %v520
        %v741 = vmul.f32 %v317, %v524
        %v742 = vmul.f32 %v318, %v528
        %v743 = vmul.f32 %v319, %v532
        %v744 = vmul.f32 %v320, %v536
        %v745 = vmul.f32 %v321, %v540
        %v746 = vmul.f32 %v322, %v544
        %v747 = vmul.f32 %v323, %v548
        %v748 = vmul.f32 %v324, %v552
        %v749 = vmul.f32 %v325, %v556
        %v750 = vmul.f32 %v326, %v560
        %v751 = vmul.f32 %v327, %v564
        %v752 = vmul.f32 %v328, %v568
        %v753 = vmul.f32 %v329, %v572
        %v754 = vmul.f32 %v330, %v576
        %v755 = vmul.f32 %v331, %v580
        %v756 = vmul.f32 %v332, %v584
        %v757 = vmul.f32 %v333, %v588
        %v758 = vmul.f32 %v334, %v592
        %v759 = vmul.f32 %v335, %v596
        %v760 = vmul.f32 %v336, %v600
        %v761 = vmul.f32 %v337, %v476
        %v762 = vmul.f32 %v338, %v480
        %v763 = vmul.f32 %v339, %v484
        %v764 = vmul.f32 %v340, %v488
        %v765 = vmul.f32 %v341, %v492
        %v766 = vmul.f32 %v342, %v496
        %v767 = vmul.f32 %v343, %v500
        %v768 = vmul.f32 %v344, %v504
        %v769 = vmul.f32 %v345, %v508
        %v770 = vmul.f32 %v346, %v512
        %v771 = vmul.f32 %v347, %v516
        %v772 = vmul.f32 %v348, %v520
        %v773 = vmul.f32 %v349, %v524
        %v774 = vmul.f32 %v350, %v528
        %v775 = vmul.f32 %v351, %v532
        %v776 = vmul.f32 %v352, %v536
        %v777 = vmul.f32 %v353, %v540
        %v778 = vmul.f32 %v354, %v544
        %v779 = vmul.f32 %v355, %v548
        %v780 = vmul.f32 %v356, %v552
        %v781 = vmul.f32 %v357, %v556
        %v782 = vmul.f32 %v358, %v560
        %v783 = vmul.f32 %v359, %v564
        %v784 = vmul.f32 %v360, %v568
        %v785 = vmul.f32 %v361, %v572
        %v786 = vmul.f32 %v362, %v576
        %v787 = vmul.f32 %v363, %v580
        %v788 = vmul.f32 %v364, %v584
        %v789 = vmul.f32 %v365, %v588
        %v790 = vmul.f32 %v366, %v592
        %v791 = vmul.f32 %v367, %v596
        %v792 = vmul.f32 %v368, %v600
        %v793 = vmul.f32 %v369, %v476
        %v794 = vmul.f32 %v370, %v480
        %v795 = vmul.f32 %v371, %v484
        %v796 = vmul.f32 %v372, %v488
        %v797 = vmul.f32 %v373, %v492
        %v798 = vmul.f32 %v374, %v496
        %v799 = vmul.f32 %v375, %v500
        %v800 = vmul.f32 %v376, %v504
        %v801 = vmul.f32 %v377, %v508
        %v802 = vmul.f32 %v378, %v512
        %v803 = vmul.f32 %v379, %v516
        %v804 = vmul.f32 %v380, %v520
        %v805 = vmul.f32 %v381, %v524
        %v806 = vmul.f32 %v382, %v528
        %v807 = vmul.f32 %v383, %v532
        %v808 = vmul.f32 %v384, %v536
        %v809 = vmul.f32 %v385, %v540
        %v810 = vmul.f32 %v386, %v544
        %v811 = vmul.f32 %v387, %v548
        %v812 = vmul.f32 %v388, %v552
        %v813 = vmul.f32 %v389, %v556
        %v814 = vmul.f32 %v390, %v560
        %v815 = vmul.f32 %v391, %v564
        %v816 = vmul.f32 %v392, %v568
        %v817 = vmul.f32 %v393, %v572
        %v818 = vmul.f32 %v394, %v576
        %v819 = vmul.f32 %v395, %v580
        %v820 = vmul.f32 %v396, %v584
        %v821 = vmul.f32 %v397, %v588
        %v822 = vmul.f32 %v398, %v592
        %v823 = vmul.f32 %v399, %v596
        %v824 = vmul.f32 %v400, %v600
        %v825 = vmul.f32 %v401, %v476
        %v826 = vmul.f32 %v402, %v480
        %v827 = vmul.f32 %v403, %v484
        %v828 = vmul.f32 %v404, %v488
        %v829 = vmul.f32 %v405, %v492
        %v830 = vmul.f32 %v406, %v496
        %v831 = vmul.f32 %v407, %v500
        %v832 = vmul.f32 %v408, %v504
        %v833 = vmul.f32 %v409, %v508
        %v834 = vmul.f32 %v410, %v512
        %v835 = vmul.f32 %v411, %v516
        %v836 = vmul.f32 %v412, %v520
        %v837 = vmul.f32 %v413, %v524
        %v838 = vmul.f32 %v414, %v528
        %v839 = vmul.f32 %v415, %v532
        %v840 = vmul.f32 %v416, %v536
        %v841 = vmul.f32 %v417, %v540
        %v842 = vmul.f32 %v418, %v544
        %v843 = vmul.f32 %v419, %v548
        %v844 = vmul.f32 %v420, %v552
        %v845 = vmul.f32 %v421, %v556
        %v846 = vmul.f32 %v422, %v560
        %v847 = vmul.f32 %v423, %v564
        %v848 = vmul.f32 %v424, %v568
        %v849 = vmul.f32 %v425, %v572
        %v850 = vmul.f32 %v426, %v576
        %v851 = vmul.f32 %v427, %v580
        %v852 = vmul.f32 %v428, %v584
        %v853 = vmul.f32 %v429, %v588
        %v854 = vmul.f32 %v430, %v592
        %v855 = vmul.f32 %v431, %v596
        %v856 = vmul.f32 %v432, %v600
        %v857 = vmul.f32 %v433, %v476
        %v858 = vmul.f32 %v434, %v480
        %v859 = vmul.f32 %v435, %v484
        %v860 = vmul.f32 %v436, %v488
        %v861 = vmul.f32 %v437, %v492
        %v862 = vmul.f32 %v438, %v496
        %v863 = vmul.f32 %v439, %v500
        %v864 = vmul.f32 %v440, %v504
        %v865 = vmul.f32 %v441, %v508
        %v866 = vmul.f32 %v442, %v512
        %v867 = vmul.f32 %v443, %v516
        %v868 = vmul.f32 %v444, %v520
        %v869 = vmul.f32 %v445, %v524
        %v870 = vmul.f32 %v446, %v528
        %v871 = vmul.f32 %v447, %v532
        %v872 = vmul.f32 %v448, %v536
        %v873 = vmul.f32 %v449, %v540
        %v874 = vmul.f32 %v450, %v544
        %v875 = vmul.f32 %v451, %v548
        %v876 = vmul.f32 %v452, %v552
        %v877 = vmul.f32 %v453, %v556
        %v878 = vmul.f32 %v454, %v560
        %v879 = vmul.f32 %v455, %v564
        %v880 = vmul.f32 %v456, %v568
        %v881 = vmul.f32 %v457, %v572
        %v882 = vmul.f32 %v458, %v576
        %v883 = vmul.f32 %v459, %v580
        %v884 = vmul.f32 %v460, %v584
        %v885 = vmul.f32 %v461, %v588
        %v886 = vmul.f32 %v462, %v592
        %v887 = vmul.f32 %v463, %v596
        %v888 = vmul.f32 %v464, %v600
        %v889 = vadd.f32 %v633, %v634
        %v890 = vadd.f32 %v889, %v635
        %v891 = vadd.f32 %v890, %v636
        %v892 = vadd.f32 %v891, %v637
        %v893 = vadd.f32 %v892, %v638
        %v894 = vadd.f32 %v893, %v639
        %v895 = vadd.f32 %v894, %v640
        %v896 = vadd.f32 %v895, %v641
        %v897 = vadd.f32 %v896, %v642
        %v898 = vadd.f32 %v897, %v643
        %v899 = vadd.f32 %v898, %v644
        %v900 = vadd.f32 %v899, %v645
        %v901 = vadd.f32 %v900, %v646
        %v902 = vadd.f32 %v901, %v647
        %v903 = vadd.f32 %v902, %v648
        %v904 = vadd.f32 %v903, %v649
        %v905 = vadd.f32 %v904, %v650
        %v906 = vadd.f32 %v905, %v651
        %v907 = vadd.f32 %v906, %v652
        %v908 = vadd.f32 %v907, %v653
        %v909 = vadd.f32 %v908, %v654
        %v910 = vadd.f32 %v909, %v655
        %v911 = vadd.f32 %v910, %v656
        %v912 = vadd.f32 %v911, %v657
        %v913 = vadd.f32 %v912, %v658
        %v914 = vadd.f32 %v913, %v659
        %v915 = vadd.f32 %v914, %v660
        %v916 = vadd.f32 %v915, %v661
        %v917 = vadd.f32 %v916, %v662
        %v918 = vadd.f32 %v917, %v663
        %v919 = vadd.f32 %v918, %v664
        %920 = vadd.xlane.f32.xlu0 %v919
        %v921 = vpop.xlane.xlu0 %920
        %v922 = vadd.f32 %v665, %v666
        %v923 = vadd.f32 %v922, %v667
        %v924 = vadd.f32 %v923, %v668
        %v925 = vadd.f32 %v924, %v669
        %v926 = vadd.f32 %v925, %v670
        %v927 = vadd.f32 %v926, %v671
        %v928 = vadd.f32 %v927, %v672
        %v929 = vadd.f32 %v928, %v673
        %v930 = vadd.f32 %v929, %v674
        %v931 = vadd.f32 %v930, %v675
        %v932 = vadd.f32 %v931, %v676
        %v933 = vadd.f32 %v932, %v677
        %v934 = vadd.f32 %v933, %v678
        %v935 = vadd.f32 %v934, %v679
        %v936 = vadd.f32 %v935, %v680
        %v937 = vadd.f32 %v936, %v681
        %v938 = vadd.f32 %v937, %v682
        %v939 = vadd.f32 %v938, %v683
        %v940 = vadd.f32 %v939, %v684
        %v941 = vadd.f32 %v940, %v685
        %v942 = vadd.f32 %v941, %v686
        %v943 = vadd.f32 %v942, %v687
        %v944 = vadd.f32 %v943, %v688
        %v945 = vadd.f32 %v944, %v689
        %v946 = vadd.f32 %v945, %v690
        %v947 = vadd.f32 %v946, %v691
        %v948 = vadd.f32 %v947, %v692
        %v949 = vadd.f32 %v948, %v693
        %v950 = vadd.f32 %v949, %v694
        %v951 = vadd.f32 %v950, %v695
        %v952 = vadd.f32 %v951, %v696
        %953 = vadd.xlane.f32.xlu0 %v952
        %v954 = vpop.xlane.xlu0 %953
        %v955 = vadd.f32 %v697, %v698
        %v956 = vadd.f32 %v955, %v699
        %v957 = vadd.f32 %v956, %v700
        %v958 = vadd.f32 %v957, %v701
        %v959 = vadd.f32 %v958, %v702
        %v960 = vadd.f32 %v959, %v703
        %v961 = vadd.f32 %v960, %v704
        %v962 = vadd.f32 %v961, %v705
        %v963 = vadd.f32 %v962, %v706
        %v964 = vadd.f32 %v963, %v707
        %v965 = vadd.f32 %v964, %v708
        %v966 = vadd.f32 %v965, %v709
        %v967 = vadd.f32 %v966, %v710
        %v968 = vadd.f32 %v967, %v711
        %v969 = vadd.f32 %v968, %v712
        %v970 = vadd.f32 %v969, %v713
        %v971 = vadd.f32 %v970, %v714
        %v972 = vadd.f32 %v971, %v715
        %v973 = vadd.f32 %v972, %v716
        %v974 = vadd.f32 %v973, %v717
        %v975 = vadd.f32 %v974, %v718
        %v976 = vadd.f32 %v975, %v719
        %v977 = vadd.f32 %v976, %v720
        %v978 = vadd.f32 %v977, %v721
        %v979 = vadd.f32 %v978, %v722
        %v980 = vadd.f32 %v979, %v723
        %v981 = vadd.f32 %v980, %v724
        %v982 = vadd.f32 %v981, %v725
        %v983 = vadd.f32 %v982, %v726
        %v984 = vadd.f32 %v983, %v727
        %v985 = vadd.f32 %v984, %v728
        %986 = vadd.xlane.f32.xlu0 %v985
        %v987 = vpop.xlane.xlu0 %986
        %v988 = vadd.f32 %v729, %v730
        %v989 = vadd.f32 %v988, %v731
        %v990 = vadd.f32 %v989, %v732
        %v991 = vadd.f32 %v990, %v733
        %v992 = vadd.f32 %v991, %v734
        %v993 = vadd.f32 %v992, %v735
        %v994 = vadd.f32 %v993, %v736
        %v995 = vadd.f32 %v994, %v737
        %v996 = vadd.f32 %v995, %v738
        %v997 = vadd.f32 %v996, %v739
        %v998 = vadd.f32 %v997, %v740
        %v999 = vadd.f32 %v998, %v741
        %v1000 = vadd.f32 %v999, %v742
        %v1001 = vadd.f32 %v1000, %v743
        %v1002 = vadd.f32 %v1001, %v744
        %v1003 = vadd.f32 %v1002, %v745
        %v1004 = vadd.f32 %v1003, %v746
        %v1005 = vadd.f32 %v1004, %v747
        %v1006 = vadd.f32 %v1005, %v748
        %v1007 = vadd.f32 %v1006, %v749
        %v1008 = vadd.f32 %v1007, %v750
        %v1009 = vadd.f32 %v1008, %v751
        %v1010 = vadd.f32 %v1009, %v752
        %v1011 = vadd.f32 %v1010, %v753
        %v1012 = vadd.f32 %v1011, %v754
        %v1013 = vadd.f32 %v1012, %v755
        %v1014 = vadd.f32 %v1013, %v756
        %v1015 = vadd.f32 %v1014, %v757
        %v1016 = vadd.f32 %v1015, %v758
        %v1017 = vadd.f32 %v1016, %v759
        %v1018 = vadd.f32 %v1017, %v760
        %1019 = vadd.xlane.f32.xlu0 %v1018
        %v1020 = vpop.xlane.xlu0 %1019
        %v1021 = vadd.f32 %v761, %v762
        %v1022 = vadd.f32 %v1021, %v763
        %v1023 = vadd.f32 %v1022, %v764
        %v1024 = vadd.f32 %v1023, %v765
        %v1025 = vadd.f32 %v1024, %v766
        %v1026 = vadd.f32 %v1025, %v767
        %v1027 = vadd.f32 %v1026, %v768
        %v1028 = vadd.f32 %v1027, %v769
        %v1029 = vadd.f32 %v1028, %v770
        %v1030 = vadd.f32 %v1029, %v771
        %v1031 = vadd.f32 %v1030, %v772
        %v1032 = vadd.f32 %v1031, %v773
        %v1033 = vadd.f32 %v1032, %v774
        %v1034 = vadd.f32 %v1033, %v775
        %v1035 = vadd.f32 %v1034, %v776
        %v1036 = vadd.f32 %v1035, %v777
        %v1037 = vadd.f32 %v1036, %v778
        %v1038 = vadd.f32 %v1037, %v779
        %v1039 = vadd.f32 %v1038, %v780
        %v1040 = vadd.f32 %v1039, %v781
        %v1041 = vadd.f32 %v1040, %v782
        %v1042 = vadd.f32 %v1041, %v783
        %v1043 = vadd.f32 %v1042, %v784
        %v1044 = vadd.f32 %v1043, %v785
        %v1045 = vadd.f32 %v1044, %v786
        %v1046 = vadd.f32 %v1045, %v787
        %v1047 = vadd.f32 %v1046, %v788
        %v1048 = vadd.f32 %v1047, %v789
        %v1049 = vadd.f32 %v1048, %v790
        %v1050 = vadd.f32 %v1049, %v791
        %v1051 = vadd.f32 %v1050, %v792
        %1052 = vadd.xlane.f32.xlu0 %v1051
        %v1053 = vpop.xlane.xlu0 %1052
        %v1054 = vadd.f32 %v793, %v794
        %v1055 = vadd.f32 %v1054, %v795
        %v1056 = vadd.f32 %v1055, %v796
        %v1057 = vadd.f32 %v1056, %v797
        %v1058 = vadd.f32 %v1057, %v798
        %v1059 = vadd.f32 %v1058, %v799
        %v1060 = vadd.f32 %v1059, %v800
        %v1061 = vadd.f32 %v1060, %v801
        %v1062 = vadd.f32 %v1061, %v802
        %v1063 = vadd.f32 %v1062, %v803
        %v1064 = vadd.f32 %v1063, %v804
        %v1065 = vadd.f32 %v1064, %v805
        %v1066 = vadd.f32 %v1065, %v806
        %v1067 = vadd.f32 %v1066, %v807
        %v1068 = vadd.f32 %v1067, %v808
        %v1069 = vadd.f32 %v1068, %v809
        %v1070 = vadd.f32 %v1069, %v810
        %v1071 = vadd.f32 %v1070, %v811
        %v1072 = vadd.f32 %v1071, %v812
        %v1073 = vadd.f32 %v1072, %v813
        %v1074 = vadd.f32 %v1073, %v814
        %v1075 = vadd.f32 %v1074, %v815
        %v1076 = vadd.f32 %v1075, %v816
        %v1077 = vadd.f32 %v1076, %v817
        %v1078 = vadd.f32 %v1077, %v818
        %v1079 = vadd.f32 %v1078, %v819
        %v1080 = vadd.f32 %v1079, %v820
        %v1081 = vadd.f32 %v1080, %v821
        %v1082 = vadd.f32 %v1081, %v822
        %v1083 = vadd.f32 %v1082, %v823
        %v1084 = vadd.f32 %v1083, %v824
        %1085 = vadd.xlane.f32.xlu0 %v1084
        %v1086 = vpop.xlane.xlu0 %1085
        %v1087 = vadd.f32 %v825, %v826
        %v1088 = vadd.f32 %v1087, %v827
        %v1089 = vadd.f32 %v1088, %v828
        %v1090 = vadd.f32 %v1089, %v829
        %v1091 = vadd.f32 %v1090, %v830
        %v1092 = vadd.f32 %v1091, %v831
        %v1093 = vadd.f32 %v1092, %v832
        %v1094 = vadd.f32 %v1093, %v833
        %v1095 = vadd.f32 %v1094, %v834
        %v1096 = vadd.f32 %v1095, %v835
        %v1097 = vadd.f32 %v1096, %v836
        %v1098 = vadd.f32 %v1097, %v837
        %v1099 = vadd.f32 %v1098, %v838
        %v1100 = vadd.f32 %v1099, %v839
        %v1101 = vadd.f32 %v1100, %v840
        %v1102 = vadd.f32 %v1101, %v841
        %v1103 = vadd.f32 %v1102, %v842
        %v1104 = vadd.f32 %v1103, %v843
        %v1105 = vadd.f32 %v1104, %v844
        %v1106 = vadd.f32 %v1105, %v845
        %v1107 = vadd.f32 %v1106, %v846
        %v1108 = vadd.f32 %v1107, %v847
        %v1109 = vadd.f32 %v1108, %v848
        %v1110 = vadd.f32 %v1109, %v849
        %v1111 = vadd.f32 %v1110, %v850
        %v1112 = vadd.f32 %v1111, %v851
        %v1113 = vadd.f32 %v1112, %v852
        %v1114 = vadd.f32 %v1113, %v853
        %v1115 = vadd.f32 %v1114, %v854
        %v1116 = vadd.f32 %v1115, %v855
        %v1117 = vadd.f32 %v1116, %v856
        %1118 = vadd.xlane.f32.xlu0 %v1117
        %v1119 = vpop.xlane.xlu0 %1118
        %v1120 = vadd.f32 %v857, %v858
        %v1121 = vadd.f32 %v1120, %v859
        %v1122 = vadd.f32 %v1121, %v860
        %v1123 = vadd.f32 %v1122, %v861
        %v1124 = vadd.f32 %v1123, %v862
        %v1125 = vadd.f32 %v1124, %v863
        %v1126 = vadd.f32 %v1125, %v864
        %v1127 = vadd.f32 %v1126, %v865
        %v1128 = vadd.f32 %v1127, %v866
        %v1129 = vadd.f32 %v1128, %v867
        %v1130 = vadd.f32 %v1129, %v868
        %v1131 = vadd.f32 %v1130, %v869
        %v1132 = vadd.f32 %v1131, %v870
        %v1133 = vadd.f32 %v1132, %v871
        %v1134 = vadd.f32 %v1133, %v872
        %v1135 = vadd.f32 %v1134, %v873
        %v1136 = vadd.f32 %v1135, %v874
        %v1137 = vadd.f32 %v1136, %v875
        %v1138 = vadd.f32 %v1137, %v876
        %v1139 = vadd.f32 %v1138, %v877
        %v1140 = vadd.f32 %v1139, %v878
        %v1141 = vadd.f32 %v1140, %v879
        %v1142 = vadd.f32 %v1141, %v880
        %v1143 = vadd.f32 %v1142, %v881
        %v1144 = vadd.f32 %v1143, %v882
        %v1145 = vadd.f32 %v1144, %v883
        %v1146 = vadd.f32 %v1145, %v884
        %v1147 = vadd.f32 %v1146, %v885
        %v1148 = vadd.f32 %v1147, %v886
        %v1149 = vadd.f32 %v1148, %v887
        %v1150 = vadd.f32 %v1149, %v888
        %1151 = vadd.xlane.f32.xlu0 %v1150
        %v1152 = vpop.xlane.xlu0 %1151
        %v1153 = vld [vmem:[#allocation2] sm:$0x1]
        %v1155 = vlaneseq
        %v1156 = vshrl.u32 %v1155, 7
        %v1157 = vsub.s32 0, %v1156
        %v1158 = vrot.slane %v1153, %v1157
        %v1160 = vadd.f32 %v921, %v1158
        %v1161 = vadd.f32 %v954, %v1158
        %v1162 = vadd.f32 %v987, %v1158
        %v1163 = vadd.f32 %v1020, %v1158
        %v1164 = vadd.f32 %v1053, %v1158
        %v1165 = vadd.f32 %v1086, %v1158
        %v1166 = vadd.f32 %v1119, %v1158
        %v1167 = vadd.f32 %v1152, %v1158
        %v1168 = vxor.u32 %v1160, 2147483648
        %v1169 = vxor.u32 %v1161, 2147483648
        %v1170 = vxor.u32 %v1162, 2147483648
        %v1171 = vxor.u32 %v1163, 2147483648
        %v1172 = vxor.u32 %v1164, 2147483648
        %v1173 = vxor.u32 %v1165, 2147483648
        %v1174 = vxor.u32 %v1166, 2147483648
        %v1175 = vxor.u32 %v1167, 2147483648
        %v1176 = vmul.f32 %v1168, 1.442695
        %v1177 = vpow.pop %v1176
        %v1178 = vmul.f32 %v1169, 1.442695
        %v1179 = vpow.pop %v1178
        %v1180 = vmul.f32 %v1170, 1.442695
        %v1181 = vpow.pop %v1180
        %v1182 = vmul.f32 %v1171, 1.442695
        %v1183 = vpow.pop %v1182
        %v1184 = vmul.f32 %v1172, 1.442695
        %v1185 = vpow.pop %v1184
        %v1186 = vmul.f32 %v1173, 1.442695
        %v1187 = vpow.pop %v1186
        %v1188 = vmul.f32 %v1174, 1.442695
        %v1189 = vpow.pop %v1188
        %v1190 = vmul.f32 %v1175, 1.442695
        %v1191 = vpow.pop %v1190
        %v1192 = vadd.f32 %v1177, 1.0
        %v1193 = vadd.f32 %v1179, 1.0
        %v1194 = vadd.f32 %v1181, 1.0
        %v1195 = vadd.f32 %v1183, 1.0
        %v1196 = vadd.f32 %v1185, 1.0
        %v1197 = vadd.f32 %v1187, 1.0
        %v1198 = vadd.f32 %v1189, 1.0
        %v1199 = vadd.f32 %v1191, 1.0
        %v1200 = vrcp.pop %v1192
        %v1201 = vmul.f32 1.0, %v1200
        %v1202 = vrcp.pop %v1193
        %v1203 = vmul.f32 1.0, %v1202
        %v1204 = vrcp.pop %v1194
        %v1205 = vmul.f32 1.0, %v1204
        %v1206 = vrcp.pop %v1195
        %v1207 = vmul.f32 1.0, %v1206
        %v1208 = vrcp.pop %v1196
        %v1209 = vmul.f32 1.0, %v1208
        %v1210 = vrcp.pop %v1197
        %v1211 = vmul.f32 1.0, %v1210
        %v1212 = vrcp.pop %v1198
        %v1213 = vmul.f32 1.0, %v1212
        %v1214 = vrcp.pop %v1199
        %v1215 = vmul.f32 1.0, %v1214
        %vm1216 = vcmask 7168
        %1217 = vst.msk [vmem:[%s207] sm:$0xff] %vm1216, %v1201
        %1218 = vst.msk [vmem:[%s207 + $0x8] sm:$0xff] %vm1216, %v1203
        %1219 = vst.msk [vmem:[%s207 + $0x10] sm:$0xff] %vm1216, %v1205
        %1220 = vst.msk [vmem:[%s207 + $0x18] sm:$0xff] %vm1216, %v1207
        %1221 = vst.msk [vmem:[%s207 + $0x20] sm:$0xff] %vm1216, %v1209
        %1222 = vst.msk [vmem:[%s207 + $0x28] sm:$0xff] %vm1216, %v1211
        %1223 = vst.msk [vmem:[%s207 + $0x30] sm:$0xff] %vm1216, %v1213
        %1224 = vst.msk [vmem:[%s207 + $0x38] sm:$0xff] %vm1216, %v1215
        %s1225 = smul.u32 8, %s20
        %p1226 = scmp.lt.s32.totalorder %s1225, 15
        %s1227 = scalar_select %p1226, %s1225, 15
        %s1228 = smul.addr %s1227, 8
        %s1229 = scalar_lea.vmem %s3, %s1228
        // Predicated region
        $region41: #{tpu_custom_call.1} parent=31 // pred_check
          %p1230 = pneg %p106
        $region42: #{tpu_custom_call.1} parent=31 // pred_check_branch
          %1232 = sbr.rel (%p1230) target = $region44
        $region43: #{tpu_custom_call.1} parent=31 // pred_region
          %s1233 = smul.u32 8, %s20
        $region44: #{tpu_custom_call.1} parent=31 // pred_fallthru
          _
      $region32: #{tpu_custom_call.1} parent=5 // pred_fallthru
        _
      %p1234 = scmp.le.s32.totalorder 2, %s15
      // Predicated region
      $region45: #{tpu_custom_call.1} parent=5 // pred_check
        %p1235 = pneg %p1234
      $region46: #{tpu_custom_call.1} parent=5 // pred_check_branch
        %1237 = sbr.rel (%p1235) target = $region48
      $region47: #{tpu_custom_call.1} parent=5 // pred_region
        %s1238 = ssub.s32 %s15, 2
        // Predicated region
        $region49: #{tpu_custom_call.1} parent=47 // pred_check
          %p1239 = pneg %p112
        $region50: #{tpu_custom_call.1} parent=47 // pred_check_branch
          %1241 = sbr.rel (%p1239) target = $region52
        $region51: #{tpu_custom_call.1} parent=47 // pred_region
          %s1242 = smul.u32 8, %s21
          %p1243 = scmp.lt.s32.totalorder %s1242, 15
          %s1244 = scalar_select %p1243, %s1242, 15
          %s1245 = smul.addr %s1244, 8
          %s1246 = scalar_lea.vmem %s3, %s1245
        $region52: #{tpu_custom_call.1} parent=47 // pred_fallthru
          _
      $region48: #{tpu_custom_call.1} parent=5 // pred_fallthru
        _
    $region6: #{tpu_custom_call.1} parent=1 // loop_footer
      %s19 = sadd.s32 1, %s15
    $region7: #{tpu_custom_call.1} parent=1 // loop_footer_branch
      %14 = sbr.rel target = $region3
    $region8: #{tpu_custom_call.1} parent=1 // loop_exit
      _
    %1247 = vsyncpa [#allocation4], 1
    %s1248 = scalar_lea.sflag [#allocation4], 1
    %1249 = vsyncpa %s1248, 1
    %1250 = vsyncpa [#allocation6], 1

</llo_original>
